<compile_context>
chip_gen: v7x
topology: tpu7x:2x2x1
jax: 0.10.0
libtpu: 0.0.40
codegen_flags: <defaults>
</compile_context>

<pallas_src>
import jax
import jax.numpy as jnp
from jax.experimental import pallas as pl
from jax.experimental.pallas import tpu as pltpu

LANE = 128      # TPU lane width
FEATURES = 2    # fc1 fan-in
HIDDEN = 8      # fc1 fan-out


def _mlp_kernel(x_ref, wd_ref, b1_ref, w2_ref, b2_ref, o_ref):
    # x_ref : (SB, 256) VMEM  -- 128 samples per row, features interleaved
    # wd_ref: (8, 256, 128) VMEM -- fused de-interleave + fc1 weight patterns
    # b1_ref: (8,) SMEM, w2_ref: (8,) SMEM, b2_ref: (1,) SMEM
    # o_ref : (SB, 128) VMEM  -- lane-dense outputs (sample 128*r + s at [r, s])
    x = x_ref[...]                                          # (SB, 256) f32
    acc = jnp.zeros(o_ref.shape, jnp.float32)
    for j in range(HIDDEN):
        # MXU: hj[r, s] = w1[0, j] * x[r, 2s] + w1[1, j] * x[r, 2s + 1]
        hj = jnp.dot(x, wd_ref[j], preferred_element_type=jnp.float32)  # (SB,128)
        acc = acc + w2_ref[j] * jnp.maximum(hj + b1_ref[j], 0.0)        # VPU
    o_ref[...] = (acc + b2_ref[0]).astype(o_ref.dtype)


def _build_fused_fc1(w1):
    """w1: (2, 8) -> (8, 256, 128) with wd[j, 2*s + f, k] = w1[f, j] * (s == k)."""
    eye = jnp.eye(LANE, dtype=jnp.float32)                              # (128,128)
    wd = w1.T.astype(jnp.float32)[:, None, :, None] * eye[None, :, None, :]
    # (8, 1, 2, 1) * (1, 128, 1, 128) -> (8, 128, 2, 128): [j, s, f, k]
    return wd.reshape(HIDDEN, FEATURES * LANE, LANE)


def motorbike_fuel_usage(x, w1, b1, w2, b2, *, max_rows_per_step=2048):
    """x: (B, 2) -> (B, 1), computed as fc2(relu(fc1(x))) in float32."""
    B = x.shape[0]
    assert x.shape == (B, FEATURES)
    x = x.astype(jnp.float32)

    rows = pl.cdiv(B, LANE)        # number of 128-sample groups
    rows = max(rows, 8)            # keep at least one full sublane tile

    # Rows per grid step: multiple of 8, and >= 2 grid steps whenever possible
    # so both v7x TensorCores get work and DMA/compute overlap is preserved.
    if rows <= 8:
        SB = rows
    else:
        SB = min(max_rows_per_step, ((pl.cdiv(rows, 2) + 7) // 8) * 8)
    grid = (pl.cdiv(rows, SB),)

    # Natural-layout input: flat row-major view of (B, 2); pad (one small copy)
    # only when B is not a multiple of 128.  No transpose anywhere.
    need = rows * FEATURES * LANE
    x_flat = x.reshape(-1)
    if need != FEATURES * B:
        x_flat = jnp.pad(x_flat, (0, need - FEATURES * B))
    x2d = x_flat.reshape(rows, FEATURES * LANE)

    wd = _build_fused_fc1(w1)                         # (8, 256, 128) f32
    b1_f = b1.astype(jnp.float32).reshape(HIDDEN)
    w2_f = w2.astype(jnp.float32).reshape(HIDDEN)
    b2_f = b2.astype(jnp.float32).reshape(1)

    flops = 2 * HIDDEN * rows * (FEATURES * LANE) * LANE + 10 * rows * LANE
    bytes_accessed = 4 * (rows * FEATURES * LANE + rows * LANE + wd.size)

    out = pl.pallas_call(
        _mlp_kernel,
        out_shape=jax.ShapeDtypeStruct((rows, LANE), jnp.float32),
        grid_spec=pl.GridSpec(
            grid=grid,
            in_specs=[
                # Batch tile (double-buffered HBM<->VMEM by the pipeline).
                pl.BlockSpec((SB, FEATURES * LANE), lambda i: (i, 0)),
                # Fused fc1 pattern weights: constant block index -> DMA'd once.
                pl.BlockSpec((HIDDEN, FEATURES * LANE, LANE), lambda i: (0, 0, 0)),
                # Tiny biases / fc2 weights live in SMEM as scalars.
                pl.BlockSpec(memory_space=pltpu.MemorySpace.SMEM),
                pl.BlockSpec(memory_space=pltpu.MemorySpace.SMEM),
                pl.BlockSpec(memory_space=pltpu.MemorySpace.SMEM),
            ],
            out_specs=pl.BlockSpec((SB, LANE), lambda i: (i, 0)),
        ),
        compiler_params=pltpu.CompilerParams(
            dimension_semantics=("parallel",),     # batch tiles are independent
            vmem_limit_bytes=48 * 1024 * 1024,
        ),
        cost_estimate=pl.CostEstimate(
            flops=flops, transcendentals=0, bytes_accessed=bytes_accessed),
    )(x2d, wd, b1_f, w2_f, b2_f)

    # (rows, 128) is row-major flat batch order; slice only in the ragged case.
    out_flat = out.reshape(rows * LANE)
    if rows * LANE != B:
        out_flat = out_flat[:B]
    return out_flat.reshape(B, 1)


def init_params(key):
    # Deterministic synthetic init mimicking nn.Linear's U(-1/sqrt(fan_in), +)
    k1, k2, k3, k4 = jax.random.split(key, 4)
    bound1 = 1.0 / jnp.sqrt(2.0)
    bound2 = 1.0 / jnp.sqrt(8.0)
    w1 = jax.random.uniform(k1, (2, 8), jnp.float32, -bound1, bound1)   # (in, out)
    b1 = jax.random.uniform(k2, (8,), jnp.float32, -bound1, bound1)
    w2 = jax.random.uniform(k3, (8, 1), jnp.float32, -bound2, bound2)   # (in, out)
    b2 = jax.random.uniform(k4, (1,), jnp.float32, -bound2, bound2)
    return w1, b1, w2, b2


def _ref_forward(x, w1, b1, w2, b2):
    return jnp.maximum(x @ w1 + b1, 0.0) @ w2 + b2


if __name__ == "__main__":
    key = jax.random.PRNGKey(0)
    kx, kp = jax.random.split(key)
    w1, b1, w2, b2 = init_params(kp)

    fwd = jax.jit(motorbike_fuel_usage)

    def check(batch):
        x = jax.random.normal(kx, (batch, FEATURES), jnp.float32)
        out = fwd(x, w1, b1, w2, b2)
        jax.block_until_ready(out)
        assert out.shape == (batch, 1)
        ref = _ref_forward(x, w1, b1, w2, b2)
        # Some TPU generations / default precisions run f32 MXU matmuls with
        # bf16-truncated operands; accept either the exact-f32 result or the
        # bf16-operand model, each with a tight tolerance.
        xb = x.astype(jnp.bfloat16).astype(jnp.float32)
        w1b = w1.astype(jnp.bfloat16).astype(jnp.float32)
        ref_b = _ref_forward(xb, w1b, b1, w2, b2)
        err = float(jnp.max(jnp.abs(out - ref)))
        err_b = float(jnp.max(jnp.abs(out - ref_b)))
        assert err < 1e-4 or err_b < 1e-3, (batch, err, err_b)

    check(8)       # tiny batch (single small tile)
    check(2053)    # ragged batch (padding + masked boundary block, 2 grid steps)
    check(8192)    # 128-aligned batch (zero-copy input path, 2 grid steps)

    print("KERNEL_OK")
</pallas_src>

<mosaic_0001>
module attributes {stable_mosaic.version = 11 : i64} {
  func.func @_mlp_kernel(%arg0: i32, %arg1: memref<8x256xf32, #tpu.memory_space<vmem>>, %arg2: memref<8x256x128xf32, #tpu.memory_space<vmem>>, %arg3: memref<8xf32, #tpu.memory_space<smem>>, %arg4: memref<8xf32, #tpu.memory_space<smem>>, %arg5: memref<1xf32, #tpu.memory_space<smem>>, %arg6: memref<8x128xf32, #tpu.memory_space<vmem>>) attributes {dimension_semantics = [#tpu.dimension_semantics<parallel>], iteration_bounds = array<i64: 1>, scalar_prefetch = 0 : i64, scratch_operands = 0 : i64, tpu.core_type = #tpu.core_type<tc>, window_params = [{transform_indices = @transform_0, window_bounds = array<i64: 8, 256>}, {pipeline_mode = #tpu.pipeline_mode<synchronous>, transform_indices = @transform_1, window_bounds = array<i64: 8, 256, 128>}, {transform_indices = @transform_2, window_bounds = array<i64: 8>}, {transform_indices = @transform_3, window_bounds = array<i64: 8>}, {transform_indices = @transform_4, window_bounds = array<i64: 1>}, {transform_indices = @transform_5, window_bounds = array<i64: 8, 128>}]} {
    %c0 = arith.constant 0 : index
    %c0_0 = arith.constant 0 : index
    %0 = vector.load %arg1[%c0, %c0_0] : memref<8x256xf32, #tpu.memory_space<vmem>>, vector<8x256xf32>
    %cst = arith.constant 0.000000e+00 : f32
    %1 = vector.broadcast %cst : f32 to vector<8x128xf32>
    %c0_1 = arith.constant 0 : index
    %c0_2 = arith.constant 0 : index
    %c0_3 = arith.constant 0 : index
    %2 = vector.load %arg2[%c0_1, %c0_2, %c0_3] : memref<8x256x128xf32, #tpu.memory_space<vmem>>, vector<1x256x128xf32>
    %3 = vector.shape_cast %2 : vector<1x256x128xf32> to vector<256x128xf32>
    %cst_4 = arith.constant dense<0.000000e+00> : vector<8x128xf32>
    %4 = tpu.matmul %0, %3, %cst_4 {dimension_numbers = #tpu.dot_dimension_numbers<[1], [0], [0], [1], [0, 0, 1, 1], [], []>} : vector<8x256xf32>, vector<256x128xf32>, vector<8x128xf32> -> vector<8x128xf32>
    %c0_5 = arith.constant 0 : index
    %5 = memref.load %arg4[%c0_5] : memref<8xf32, #tpu.memory_space<smem>>
    %c0_6 = arith.constant 0 : index
    %6 = memref.load %arg3[%c0_6] : memref<8xf32, #tpu.memory_space<smem>>
    %7 = vector.broadcast %6 : f32 to vector<8x128xf32>
    %8 = arith.addf %4, %7 : vector<8x128xf32>
    %cst_7 = arith.constant 0.000000e+00 : f32
    %9 = vector.broadcast %cst_7 : f32 to vector<8x128xf32>
    %10 = arith.maximumf %8, %9 : vector<8x128xf32>
    %11 = vector.broadcast %5 : f32 to vector<8x128xf32>
    %12 = arith.mulf %11, %10 : vector<8x128xf32>
    %13 = arith.addf %1, %12 : vector<8x128xf32>
    %c1 = arith.constant 1 : index
    %c0_8 = arith.constant 0 : index
    %c0_9 = arith.constant 0 : index
    %14 = vector.load %arg2[%c1, %c0_8, %c0_9] : memref<8x256x128xf32, #tpu.memory_space<vmem>>, vector<1x256x128xf32>
    %15 = vector.shape_cast %14 : vector<1x256x128xf32> to vector<256x128xf32>
    %cst_10 = arith.constant dense<0.000000e+00> : vector<8x128xf32>
    %16 = tpu.matmul %0, %15, %cst_10 {dimension_numbers = #tpu.dot_dimension_numbers<[1], [0], [0], [1], [0, 0, 1, 1], [], []>} : vector<8x256xf32>, vector<256x128xf32>, vector<8x128xf32> -> vector<8x128xf32>
    %c1_11 = arith.constant 1 : index
    %17 = memref.load %arg4[%c1_11] : memref<8xf32, #tpu.memory_space<smem>>
    %c1_12 = arith.constant 1 : index
    %18 = memref.load %arg3[%c1_12] : memref<8xf32, #tpu.memory_space<smem>>
    %19 = vector.broadcast %18 : f32 to vector<8x128xf32>
    %20 = arith.addf %16, %19 : vector<8x128xf32>
    %cst_13 = arith.constant 0.000000e+00 : f32
    %21 = vector.broadcast %cst_13 : f32 to vector<8x128xf32>
    %22 = arith.maximumf %20, %21 : vector<8x128xf32>
    %23 = vector.broadcast %17 : f32 to vector<8x128xf32>
    %24 = arith.mulf %23, %22 : vector<8x128xf32>
    %25 = arith.addf %13, %24 : vector<8x128xf32>
    %c2 = arith.constant 2 : index
    %c0_14 = arith.constant 0 : index
    %c0_15 = arith.constant 0 : index
    %26 = vector.load %arg2[%c2, %c0_14, %c0_15] : memref<8x256x128xf32, #tpu.memory_space<vmem>>, vector<1x256x128xf32>
    %27 = vector.shape_cast %26 : vector<1x256x128xf32> to vector<256x128xf32>
    %cst_16 = arith.constant dense<0.000000e+00> : vector<8x128xf32>
    %28 = tpu.matmul %0, %27, %cst_16 {dimension_numbers = #tpu.dot_dimension_numbers<[1], [0], [0], [1], [0, 0, 1, 1], [], []>} : vector<8x256xf32>, vector<256x128xf32>, vector<8x128xf32> -> vector<8x128xf32>
    %c2_17 = arith.constant 2 : index
    %29 = memref.load %arg4[%c2_17] : memref<8xf32, #tpu.memory_space<smem>>
    %c2_18 = arith.constant 2 : index
    %30 = memref.load %arg3[%c2_18] : memref<8xf32, #tpu.memory_space<smem>>
    %31 = vector.broadcast %30 : f32 to vector<8x128xf32>
    %32 = arith.addf %28, %31 : vector<8x128xf32>
    %cst_19 = arith.constant 0.000000e+00 : f32
    %33 = vector.broadcast %cst_19 : f32 to vector<8x128xf32>
    %34 = arith.maximumf %32, %33 : vector<8x128xf32>
    %35 = vector.broadcast %29 : f32 to vector<8x128xf32>
    %36 = arith.mulf %35, %34 : vector<8x128xf32>
    %37 = arith.addf %25, %36 : vector<8x128xf32>
    %c3 = arith.constant 3 : index
    %c0_20 = arith.constant 0 : index
    %c0_21 = arith.constant 0 : index
    %38 = vector.load %arg2[%c3, %c0_20, %c0_21] : memref<8x256x128xf32, #tpu.memory_space<vmem>>, vector<1x256x128xf32>
    %39 = vector.shape_cast %38 : vector<1x256x128xf32> to vector<256x128xf32>
    %cst_22 = arith.constant dense<0.000000e+00> : vector<8x128xf32>
    %40 = tpu.matmul %0, %39, %cst_22 {dimension_numbers = #tpu.dot_dimension_numbers<[1], [0], [0], [1], [0, 0, 1, 1], [], []>} : vector<8x256xf32>, vector<256x128xf32>, vector<8x128xf32> -> vector<8x128xf32>
    %c3_23 = arith.constant 3 : index
    %41 = memref.load %arg4[%c3_23] : memref<8xf32, #tpu.memory_space<smem>>
    %c3_24 = arith.constant 3 : index
    %42 = memref.load %arg3[%c3_24] : memref<8xf32, #tpu.memory_space<smem>>
    %43 = vector.broadcast %42 : f32 to vector<8x128xf32>
    %44 = arith.addf %40, %43 : vector<8x128xf32>
    %cst_25 = arith.constant 0.000000e+00 : f32
    %45 = vector.broadcast %cst_25 : f32 to vector<8x128xf32>
    %46 = arith.maximumf %44, %45 : vector<8x128xf32>
    %47 = vector.broadcast %41 : f32 to vector<8x128xf32>
    %48 = arith.mulf %47, %46 : vector<8x128xf32>
    %49 = arith.addf %37, %48 : vector<8x128xf32>
    %c4 = arith.constant 4 : index
    %c0_26 = arith.constant 0 : index
    %c0_27 = arith.constant 0 : index
    %50 = vector.load %arg2[%c4, %c0_26, %c0_27] : memref<8x256x128xf32, #tpu.memory_space<vmem>>, vector<1x256x128xf32>
    %51 = vector.shape_cast %50 : vector<1x256x128xf32> to vector<256x128xf32>
    %cst_28 = arith.constant dense<0.000000e+00> : vector<8x128xf32>
    %52 = tpu.matmul %0, %51, %cst_28 {dimension_numbers = #tpu.dot_dimension_numbers<[1], [0], [0], [1], [0, 0, 1, 1], [], []>} : vector<8x256xf32>, vector<256x128xf32>, vector<8x128xf32> -> vector<8x128xf32>
    %c4_29 = arith.constant 4 : index
    %53 = memref.load %arg4[%c4_29] : memref<8xf32, #tpu.memory_space<smem>>
    %c4_30 = arith.constant 4 : index
    %54 = memref.load %arg3[%c4_30] : memref<8xf32, #tpu.memory_space<smem>>
    %55 = vector.broadcast %54 : f32 to vector<8x128xf32>
    %56 = arith.addf %52, %55 : vector<8x128xf32>
    %cst_31 = arith.constant 0.000000e+00 : f32
    %57 = vector.broadcast %cst_31 : f32 to vector<8x128xf32>
    %58 = arith.maximumf %56, %57 : vector<8x128xf32>
    %59 = vector.broadcast %53 : f32 to vector<8x128xf32>
    %60 = arith.mulf %59, %58 : vector<8x128xf32>
    %61 = arith.addf %49, %60 : vector<8x128xf32>
    %c5 = arith.constant 5 : index
    %c0_32 = arith.constant 0 : index
    %c0_33 = arith.constant 0 : index
    %62 = vector.load %arg2[%c5, %c0_32, %c0_33] : memref<8x256x128xf32, #tpu.memory_space<vmem>>, vector<1x256x128xf32>
    %63 = vector.shape_cast %62 : vector<1x256x128xf32> to vector<256x128xf32>
    %cst_34 = arith.constant dense<0.000000e+00> : vector<8x128xf32>
    %64 = tpu.matmul %0, %63, %cst_34 {dimension_numbers = #tpu.dot_dimension_numbers<[1], [0], [0], [1], [0, 0, 1, 1], [], []>} : vector<8x256xf32>, vector<256x128xf32>, vector<8x128xf32> -> vector<8x128xf32>
    %c5_35 = arith.constant 5 : index
    %65 = memref.load %arg4[%c5_35] : memref<8xf32, #tpu.memory_space<smem>>
    %c5_36 = arith.constant 5 : index
    %66 = memref.load %arg3[%c5_36] : memref<8xf32, #tpu.memory_space<smem>>
    %67 = vector.broadcast %66 : f32 to vector<8x128xf32>
    %68 = arith.addf %64, %67 : vector<8x128xf32>
    %cst_37 = arith.constant 0.000000e+00 : f32
    %69 = vector.broadcast %cst_37 : f32 to vector<8x128xf32>
    %70 = arith.maximumf %68, %69 : vector<8x128xf32>
    %71 = vector.broadcast %65 : f32 to vector<8x128xf32>
    %72 = arith.mulf %71, %70 : vector<8x128xf32>
    %73 = arith.addf %61, %72 : vector<8x128xf32>
    %c6 = arith.constant 6 : index
    %c0_38 = arith.constant 0 : index
    %c0_39 = arith.constant 0 : index
    %74 = vector.load %arg2[%c6, %c0_38, %c0_39] : memref<8x256x128xf32, #tpu.memory_space<vmem>>, vector<1x256x128xf32>
    %75 = vector.shape_cast %74 : vector<1x256x128xf32> to vector<256x128xf32>
    %cst_40 = arith.constant dense<0.000000e+00> : vector<8x128xf32>
    %76 = tpu.matmul %0, %75, %cst_40 {dimension_numbers = #tpu.dot_dimension_numbers<[1], [0], [0], [1], [0, 0, 1, 1], [], []>} : vector<8x256xf32>, vector<256x128xf32>, vector<8x128xf32> -> vector<8x128xf32>
    %c6_41 = arith.constant 6 : index
    %77 = memref.load %arg4[%c6_41] : memref<8xf32, #tpu.memory_space<smem>>
    %c6_42 = arith.constant 6 : index
    %78 = memref.load %arg3[%c6_42] : memref<8xf32, #tpu.memory_space<smem>>
    %79 = vector.broadcast %78 : f32 to vector<8x128xf32>
    %80 = arith.addf %76, %79 : vector<8x128xf32>
    %cst_43 = arith.constant 0.000000e+00 : f32
    %81 = vector.broadcast %cst_43 : f32 to vector<8x128xf32>
    %82 = arith.maximumf %80, %81 : vector<8x128xf32>
    %83 = vector.broadcast %77 : f32 to vector<8x128xf32>
    %84 = arith.mulf %83, %82 : vector<8x128xf32>
    %85 = arith.addf %73, %84 : vector<8x128xf32>
    %c7 = arith.constant 7 : index
    %c0_44 = arith.constant 0 : index
    %c0_45 = arith.constant 0 : index
    %86 = vector.load %arg2[%c7, %c0_44, %c0_45] : memref<8x256x128xf32, #tpu.memory_space<vmem>>, vector<1x256x128xf32>
    %87 = vector.shape_cast %86 : vector<1x256x128xf32> to vector<256x128xf32>
    %cst_46 = arith.constant dense<0.000000e+00> : vector<8x128xf32>
    %88 = tpu.matmul %0, %87, %cst_46 {dimension_numbers = #tpu.dot_dimension_numbers<[1], [0], [0], [1], [0, 0, 1, 1], [], []>} : vector<8x256xf32>, vector<256x128xf32>, vector<8x128xf32> -> vector<8x128xf32>
    %c7_47 = arith.constant 7 : index
    %89 = memref.load %arg4[%c7_47] : memref<8xf32, #tpu.memory_space<smem>>
    %c7_48 = arith.constant 7 : index
    %90 = memref.load %arg3[%c7_48] : memref<8xf32, #tpu.memory_space<smem>>
    %91 = vector.broadcast %90 : f32 to vector<8x128xf32>
    %92 = arith.addf %88, %91 : vector<8x128xf32>
    %cst_49 = arith.constant 0.000000e+00 : f32
    %93 = vector.broadcast %cst_49 : f32 to vector<8x128xf32>
    %94 = arith.maximumf %92, %93 : vector<8x128xf32>
    %95 = vector.broadcast %89 : f32 to vector<8x128xf32>
    %96 = arith.mulf %95, %94 : vector<8x128xf32>
    %97 = arith.addf %85, %96 : vector<8x128xf32>
    %c0_50 = arith.constant 0 : index
    %98 = memref.load %arg5[%c0_50] : memref<1xf32, #tpu.memory_space<smem>>
    %99 = vector.broadcast %98 : f32 to vector<8x128xf32>
    %100 = arith.addf %97, %99 : vector<8x128xf32>
    %c0_51 = arith.constant 0 : index
    %c0_52 = arith.constant 0 : index
    %101 = vector.load %arg6[%c0_51, %c0_52] : memref<8x128xf32, #tpu.memory_space<vmem>>, vector<8x128xf32>
    tpu.vector_store %arg6[%c0_51, %c0_52], %100 {strides = array<i32>} : memref<8x128xf32, #tpu.memory_space<vmem>>, vector<8x128xf32>,
    return
  }
  func.func @transform_0(%arg0: i32) -> (i32, i32) {
    %c0_i32 = arith.constant 0 : i32
    %c0_i32_0 = arith.constant 0 : i32
    return %arg0, %c0_i32 : i32, i32
  }
  func.func @transform_1(%arg0: i32) -> (i32, i32, i32) {
    %c0_i32 = arith.constant 0 : i32
    %c0_i32_0 = arith.constant 0 : i32
    %c0_i32_1 = arith.constant 0 : i32
    %c0_i32_2 = arith.constant 0 : i32
    return %c0_i32, %c0_i32_0, %c0_i32_1 : i32, i32, i32
  }
  func.func @transform_2(%arg0: i32) -> i32 {
    %c0_i32 = arith.constant 0 : i32
    %c0_i32_0 = arith.constant 0 : i32
    return %c0_i32 : i32
  }
  func.func @transform_3(%arg0: i32) -> i32 {
    %c0_i32 = arith.constant 0 : i32
    %c0_i32_0 = arith.constant 0 : i32
    return %c0_i32 : i32
  }
  func.func @transform_4(%arg0: i32) -> i32 {
    %c0_i32 = arith.constant 0 : i32
    %c0_i32_0 = arith.constant 0 : i32
    return %c0_i32 : i32
  }
  func.func @transform_5(%arg0: i32) -> (i32, i32) {
    %c0_i32 = arith.constant 0 : i32
    %c0_i32_0 = arith.constant 0 : i32
    return %arg0, %c0_i32 : i32, i32
  }
}

</mosaic_0001>

<llo_original>
// kernel: motorbike_fuel_usage.1
$region0: #{motorbike_fuel_usage.1}
  #allocation0 [shape = 'u32[]', space=smem, size = 0x4, offset = 0x4, fixed_abs, tag = 'smem constant byte address 0x4 - core index']
  #allocation1 [shape = 'u32[144,128]{1,0:T(1,128)}', space=vmem, size = 0x12000, scoped, tag = 'internal scratch']
  #allocation2 [shape = 'f32[1]{0:T(128)S(6)}', space=smem, size = 0x200, scoped, tag = 'scoped memory for motorbike_fuel_usage.1']
  %s0 = inlined_call_operand.vmem [shape: f32[8,256], index: 0, kind: input, shape index: {}]
  %s1 = inlined_call_operand.vmem [shape: f32[8,256,128], index: 1, kind: input, shape index: {}]
  %s2 = inlined_call_operand.vmem [shape: f32[8], index: 2, kind: input, shape index: {}]
  %s3 = inlined_call_operand.vmem [shape: f32[8], index: 3, kind: input, shape index: {}]
  %s4 = inlined_call_operand.<no memory space> [shape: f32[1], index: 4, kind: input, shape index: {}]
  %s5 = inlined_call_operand.vmem [shape: f32[8,128], index: 5, kind: output, shape index: {}]
  %s6 = sld [smem:[#allocation0]]
  $region38: #{motorbike_fuel_usage.1} parent=0
    _
  %s8 = ssub.s32 1, %s6
  %s9 = scalar_select 0, %s8, %s6
  %10 = sst [smem:[#allocation2]] %s4
  $region1: #{motorbike_fuel_usage.1} parent=0
    #allocation3 [shape = 'u8[512]{0}', space=smem, size = 0x200, scoped, tag = 'input window, operand 2, single buffered']
    #allocation4 [shape = 's32[1]{0}', space=sflag, size = 0x4, scoped, tag = 'scoped memory for motorbike_fuel_usage.1']
    #allocation5 [shape = 'u8[512]{0}', space=smem, size = 0x200, scoped, tag = 'input window, operand 3, single buffered']
    #allocation6 [shape = 's32[1]{0}', space=sflag, size = 0x4, scoped, tag = 'scoped memory for motorbike_fuel_usage.1']
    %11 = vsyncpa [#allocation4], 0
    %12 = vsyncpa [#allocation6], 0
    // Predicated region
    $region2: #{motorbike_fuel_usage.1} parent=1 // pred_check
      _
    $region3: #{motorbike_fuel_usage.1} parent=1 // pred_check_branch
      %14 = sbr.rel (0) target = $region5
    $region4: #{motorbike_fuel_usage.1} parent=1 // pred_region
      _
    $region5: #{motorbike_fuel_usage.1} parent=1 // pred_fallthru
      _
    // Predicated region
    $region6: #{motorbike_fuel_usage.1} parent=1 // pred_check
      _
    $region7: #{motorbike_fuel_usage.1} parent=1 // pred_check_branch
      %16 = sbr.rel (0) target = $region9
    $region8: #{motorbike_fuel_usage.1} parent=1 // pred_region
      _
    $region9: #{motorbike_fuel_usage.1} parent=1 // pred_fallthru
      _
    // Predicated region
    $region10: #{motorbike_fuel_usage.1} parent=1 // pred_check
      _
    $region11: #{motorbike_fuel_usage.1} parent=1 // pred_check_branch
      %18 = sbr.rel (0) target = $region13
    $region12: #{motorbike_fuel_usage.1} parent=1 // pred_region
      %s20 = ssub.s32 16, 16
      %21 = vsyncadd [#allocation4], %s20
      %s23 = sshll.u32 %s2, 4
      %s24 = int_to_ptr.vmem [resolvable:$true] %s23
      %26 = dma.vmem_to_smem %s24, 16, [#allocation3], [#allocation4]
    $region13: #{motorbike_fuel_usage.1} parent=1 // pred_fallthru
      _
    // Predicated region
    $region14: #{motorbike_fuel_usage.1} parent=1 // pred_check
      _
    $region15: #{motorbike_fuel_usage.1} parent=1 // pred_check_branch
      %28 = sbr.rel (0) target = $region17
    $region16: #{motorbike_fuel_usage.1} parent=1 // pred_region
      %s30 = ssub.s32 16, 16
      %31 = vsyncadd [#allocation6], %s30
      %s33 = sshll.u32 %s3, 4
      %s34 = int_to_ptr.vmem [resolvable:$true] %s33
      %36 = dma.vmem_to_smem %s34, 16, [#allocation5], [#allocation6]
    $region17: #{motorbike_fuel_usage.1} parent=1 // pred_fallthru
      _
    // Predicated region
    $region18: #{motorbike_fuel_usage.1} parent=1 // pred_check
      _
    $region19: #{motorbike_fuel_usage.1} parent=1 // pred_check_branch
      %38 = sbr.rel (0) target = $region21
    $region20: #{motorbike_fuel_usage.1} parent=1 // pred_region
      _
    $region21: #{motorbike_fuel_usage.1} parent=1 // pred_fallthru
      _
    // Predicated region
    $region22: #{motorbike_fuel_usage.1} parent=1 // pred_check
      _
    $region23: #{motorbike_fuel_usage.1} parent=1 // pred_check_branch
      %40 = sbr.rel (0) target = $region25
    $region24: #{motorbike_fuel_usage.1} parent=1 // pred_region
      %41 = dma.done [#allocation4], 16
    $region25: #{motorbike_fuel_usage.1} parent=1 // pred_fallthru
      _
    // Predicated region
    $region26: #{motorbike_fuel_usage.1} parent=1 // pred_check
      _
    $region27: #{motorbike_fuel_usage.1} parent=1 // pred_check_branch
      %43 = sbr.rel (0) target = $region29
    $region28: #{motorbike_fuel_usage.1} parent=1 // pred_region
      %44 = dma.done [#allocation6], 16
    $region29: #{motorbike_fuel_usage.1} parent=1 // pred_fallthru
      _
    %45 = sfence
    %v46 = vld [vmem:[%s0] sm:$0xff]
    %v47 = vld [vmem:[%s0 + $0x8] sm:$0xff]
    %v48 = vld [vmem:[%s1] sm:$0xff]
    %v49 = vld [vmem:[%s1 + $0x8] sm:$0xff]
    %v50 = vld [vmem:[%s1 + $0x10] sm:$0xff]
    %v51 = vld [vmem:[%s1 + $0x18] sm:$0xff]
    %v52 = vld [vmem:[%s1 + $0x20] sm:$0xff]
    %v53 = vld [vmem:[%s1 + $0x28] sm:$0xff]
    %v54 = vld [vmem:[%s1 + $0x30] sm:$0xff]
    %v55 = vld [vmem:[%s1 + $0x38] sm:$0xff]
    %v56 = vld [vmem:[%s1 + $0x40] sm:$0xff]
    %v57 = vld [vmem:[%s1 + $0x48] sm:$0xff]
    %v58 = vld [vmem:[%s1 + $0x50] sm:$0xff]
    %v59 = vld [vmem:[%s1 + $0x58] sm:$0xff]
    %v60 = vld [vmem:[%s1 + $0x60] sm:$0xff]
    %v61 = vld [vmem:[%s1 + $0x68] sm:$0xff]
    %v62 = vld [vmem:[%s1 + $0x70] sm:$0xff]
    %v63 = vld [vmem:[%s1 + $0x78] sm:$0xff]
    %v64 = vld [vmem:[%s1 + $0x80] sm:$0xff]
    %v65 = vld [vmem:[%s1 + $0x88] sm:$0xff]
    %v66 = vld [vmem:[%s1 + $0x90] sm:$0xff]
    %v67 = vld [vmem:[%s1 + $0x98] sm:$0xff]
    %v68 = vld [vmem:[%s1 + $0xa0] sm:$0xff]
    %v69 = vld [vmem:[%s1 + $0xa8] sm:$0xff]
    %v70 = vld [vmem:[%s1 + $0xb0] sm:$0xff]
    %v71 = vld [vmem:[%s1 + $0xb8] sm:$0xff]
    %v72 = vld [vmem:[%s1 + $0xc0] sm:$0xff]
    %v73 = vld [vmem:[%s1 + $0xc8] sm:$0xff]
    %v74 = vld [vmem:[%s1 + $0xd0] sm:$0xff]
    %v75 = vld [vmem:[%s1 + $0xd8] sm:$0xff]
    %v76 = vld [vmem:[%s1 + $0xe0] sm:$0xff]
    %v77 = vld [vmem:[%s1 + $0xe8] sm:$0xff]
    %v78 = vld [vmem:[%s1 + $0xf0] sm:$0xff]
    %v79 = vld [vmem:[%s1 + $0xf8] sm:$0xff]
    %s80 = sld [smem:[#allocation5]]
    %s81 = sld [smem:[#allocation3]]
    %v82 = vstv %s81
    %83 = vmatprep.subr.mxu0 0.0
    %84 = vmatpush1.msra.mxu0 %v48
    %85 = vmatprep.subr.mxu0 0.0
    %86 = vmatpush1.msra.mxu0 %v49
    %87 = vmatprep.subr.mxu0 0.0
    %88 = vmatpush1.msra.mxu0 %v50
    %89 = vmatprep.subr.mxu0 0.0
    %90 = vmatpush1.msra.mxu0 %v51
    %91 = vmatprep.subr.mxu0 0.0
    %92 = vmatpush1.msra.mxu0 %v52
    %93 = vmatprep.subr.mxu0 0.0
    %94 = vmatpush1.msra.mxu0 %v53
    %95 = vmatprep.subr.mxu0 0.0
    %96 = vmatpush1.msra.mxu0 %v54
    %97 = vmatprep.subr.mxu0 0.0
    %98 = vmatpush1.msra.mxu0 %v55
    %99 = vmatprep.subr.mxu0 0.0
    %100 = vmatpush1.msra.mxu0 %v56
    %101 = vmatprep.subr.mxu0 0.0
    %102 = vmatpush1.msra.mxu0 %v57
    %103 = vmatprep.subr.mxu0 0.0
    %104 = vmatpush1.msra.mxu0 %v58
    %105 = vmatprep.subr.mxu0 0.0
    %106 = vmatpush1.msra.mxu0 %v59
    %107 = vmatprep.subr.mxu0 0.0
    %108 = vmatpush1.msra.mxu0 %v60
    %109 = vmatprep.subr.mxu0 0.0
    %110 = vmatpush1.msra.mxu0 %v61
    %111 = vmatprep.subr.mxu0 0.0
    %112 = vmatpush1.msra.mxu0 %v62
    %113 = vmatprep.subr.mxu0 0.0
    %114 = vmatpush1.msra.mxu0 %v63
    %115 = vmatprep.subr.mxu0 0.0
    %116 = vmatpush1.msra.mxu0 %v64
    %117 = vmatprep.subr.mxu0 0.0
    %118 = vmatpush1.msra.mxu0 %v65
    %119 = vmatprep.subr.mxu0 0.0
    %120 = vmatpush1.msra.mxu0 %v66
    %121 = vmatprep.subr.mxu0 0.0
    %122 = vmatpush1.msra.mxu0 %v67
    %123 = vmatprep.subr.mxu0 0.0
    %124 = vmatpush1.msra.mxu0 %v68
    %125 = vmatprep.subr.mxu0 0.0
    %126 = vmatpush1.msra.mxu0 %v69
    %127 = vmatprep.subr.mxu0 0.0
    %128 = vmatpush1.msra.mxu0 %v70
    %129 = vmatprep.subr.mxu0 0.0
    %130 = vmatpush1.msra.mxu0 %v71
    %131 = vmatprep.subr.mxu0 0.0
    %132 = vmatpush1.msra.mxu0 %v72
    %133 = vmatprep.subr.mxu0 0.0
    %134 = vmatpush1.msra.mxu0 %v73
    %135 = vmatprep.subr.mxu0 0.0
    %136 = vmatpush1.msra.mxu0 %v74
    %137 = vmatprep.subr.mxu0 0.0
    %138 = vmatpush1.msra.mxu0 %v75
    %139 = vmatprep.subr.mxu0 0.0
    %140 = vmatpush1.msra.mxu0 %v76
    %141 = vmatprep.subr.mxu0 0.0
    %142 = vmatpush1.msra.mxu0 %v77
    %143 = vmatprep.subr.mxu0 0.0
    %144 = vmatpush1.msra.mxu0 %v78
    %145 = vmatprep.subr.mxu0 0.0
    %146 = vmatpush1.msra.mxu0 %v79
    %147 = vmatprep.mubr.f32.mxu0 %v47
    %148 = vmatmul.mubr.f32.gmra.mrb[0].mxu0 %v46
    %v149 = vpop.f32.mrb[0].mxu0
    %v150 = vadd.f32 %v82, %v149
    %v151 = vpop.f32.mrb[0].mxu0
    %152 = vdwg.mxu0
    %v153 = vmax.f32 %v150, 0.0
    %v154 = vstv %s80
    %v155 = vmul.f32 %v154, %v153
    %v156 = vadd.f32 %v155, 0.0
    %s157 = scalar_lea.vmem %s1, 256
    %v158 = vld [vmem:[%s157] sm:$0xff]
    %v159 = vld [vmem:[%s157 + $0x8] sm:$0xff]
    %v160 = vld [vmem:[%s157 + $0x10] sm:$0xff]
    %v161 = vld [vmem:[%s157 + $0x18] sm:$0xff]
    %v162 = vld [vmem:[%s157 + $0x20] sm:$0xff]
    %v163 = vld [vmem:[%s157 + $0x28] sm:$0xff]
    %v164 = vld [vmem:[%s157 + $0x30] sm:$0xff]
    %v165 = vld [vmem:[%s157 + $0x38] sm:$0xff]
    %v166 = vld [vmem:[%s157 + $0x40] sm:$0xff]
    %v167 = vld [vmem:[%s157 + $0x48] sm:$0xff]
    %v168 = vld [vmem:[%s157 + $0x50] sm:$0xff]
    %v169 = vld [vmem:[%s157 + $0x58] sm:$0xff]
    %v170 = vld [vmem:[%s157 + $0x60] sm:$0xff]
    %v171 = vld [vmem:[%s157 + $0x68] sm:$0xff]
    %v172 = vld [vmem:[%s157 + $0x70] sm:$0xff]
    %v173 = vld [vmem:[%s157 + $0x78] sm:$0xff]
    %v174 = vld [vmem:[%s157 + $0x80] sm:$0xff]
    %v175 = vld [vmem:[%s157 + $0x88] sm:$0xff]
    %v176 = vld [vmem:[%s157 + $0x90] sm:$0xff]
    %v177 = vld [vmem:[%s157 + $0x98] sm:$0xff]
    %v178 = vld [vmem:[%s157 + $0xa0] sm:$0xff]
    %v179 = vld [vmem:[%s157 + $0xa8] sm:$0xff]
    %v180 = vld [vmem:[%s157 + $0xb0] sm:$0xff]
    %v181 = vld [vmem:[%s157 + $0xb8] sm:$0xff]
    %v182 = vld [vmem:[%s157 + $0xc0] sm:$0xff]
    %v183 = vld [vmem:[%s157 + $0xc8] sm:$0xff]
    %v184 = vld [vmem:[%s157 + $0xd0] sm:$0xff]
    %v185 = vld [vmem:[%s157 + $0xd8] sm:$0xff]
    %v186 = vld [vmem:[%s157 + $0xe0] sm:$0xff]
    %v187 = vld [vmem:[%s157 + $0xe8] sm:$0xff]
    %v188 = vld [vmem:[%s157 + $0xf0] sm:$0xff]
    %v189 = vld [vmem:[%s157 + $0xf8] sm:$0xff]
    %s190 = sld [smem:[#allocation5 + $0x1]]
    %s191 = sld [smem:[#allocation3 + $0x1]]
    %v192 = vstv %s191
    %193 = vmatprep.subr.mxu0 0.0
    %194 = vmatpush1.msra.mxu0 %v158
    %195 = vmatprep.subr.mxu0 0.0
    %196 = vmatpush1.msra.mxu0 %v159
    %197 = vmatprep.subr.mxu0 0.0
    %198 = vmatpush1.msra.mxu0 %v160
    %199 = vmatprep.subr.mxu0 0.0
    %200 = vmatpush1.msra.mxu0 %v161
    %201 = vmatprep.subr.mxu0 0.0
    %202 = vmatpush1.msra.mxu0 %v162
    %203 = vmatprep.subr.mxu0 0.0
    %204 = vmatpush1.msra.mxu0 %v163
    %205 = vmatprep.subr.mxu0 0.0
    %206 = vmatpush1.msra.mxu0 %v164
    %207 = vmatprep.subr.mxu0 0.0
    %208 = vmatpush1.msra.mxu0 %v165
    %209 = vmatprep.subr.mxu0 0.0
    %210 = vmatpush1.msra.mxu0 %v166
    %211 = vmatprep.subr.mxu0 0.0
    %212 = vmatpush1.msra.mxu0 %v167
    %213 = vmatprep.subr.mxu0 0.0
    %214 = vmatpush1.msra.mxu0 %v168
    %215 = vmatprep.subr.mxu0 0.0
    %216 = vmatpush1.msra.mxu0 %v169
    %217 = vmatprep.subr.mxu0 0.0
    %218 = vmatpush1.msra.mxu0 %v170
    %219 = vmatprep.subr.mxu0 0.0
    %220 = vmatpush1.msra.mxu0 %v171
    %221 = vmatprep.subr.mxu0 0.0
    %222 = vmatpush1.msra.mxu0 %v172
    %223 = vmatprep.subr.mxu0 0.0
    %224 = vmatpush1.msra.mxu0 %v173
    %225 = vmatprep.subr.mxu0 0.0
    %226 = vmatpush1.msra.mxu0 %v174
    %227 = vmatprep.subr.mxu0 0.0
    %228 = vmatpush1.msra.mxu0 %v175
    %229 = vmatprep.subr.mxu0 0.0
    %230 = vmatpush1.msra.mxu0 %v176
    %231 = vmatprep.subr.mxu0 0.0
    %232 = vmatpush1.msra.mxu0 %v177
    %233 = vmatprep.subr.mxu0 0.0
    %234 = vmatpush1.msra.mxu0 %v178
    %235 = vmatprep.subr.mxu0 0.0
    %236 = vmatpush1.msra.mxu0 %v179
    %237 = vmatprep.subr.mxu0 0.0
    %238 = vmatpush1.msra.mxu0 %v180
    %239 = vmatprep.subr.mxu0 0.0
    %240 = vmatpush1.msra.mxu0 %v181
    %241 = vmatprep.subr.mxu0 0.0
    %242 = vmatpush1.msra.mxu0 %v182
    %243 = vmatprep.subr.mxu0 0.0
    %244 = vmatpush1.msra.mxu0 %v183
    %245 = vmatprep.subr.mxu0 0.0
    %246 = vmatpush1.msra.mxu0 %v184
    %247 = vmatprep.subr.mxu0 0.0
    %248 = vmatpush1.msra.mxu0 %v185
    %249 = vmatprep.subr.mxu0 0.0
    %250 = vmatpush1.msra.mxu0 %v186
    %251 = vmatprep.subr.mxu0 0.0
    %252 = vmatpush1.msra.mxu0 %v187
    %253 = vmatprep.subr.mxu0 0.0
    %254 = vmatpush1.msra.mxu0 %v188
    %255 = vmatprep.subr.mxu0 0.0
    %256 = vmatpush1.msra.mxu0 %v189
    %257 = vmatprep.mubr.f32.mxu0 %v47
    %258 = vmatmul.mubr.f32.gmra.mrb[0].mxu0 %v46
    %v259 = vpop.f32.mrb[0].mxu0
    %v260 = vadd.f32 %v192, %v259
    %v261 = vpop.f32.mrb[0].mxu0
    %262 = vdwg.mxu0
    %v263 = vmax.f32 %v260, 0.0
    %v264 = vstv %s190
    %v265 = vmul.f32 %v264, %v263
    %v266 = vadd.f32 %v156, %v265
    %s267 = scalar_lea.vmem %s1, 512
    %v268 = vld [vmem:[%s267] sm:$0xff]
    %v269 = vld [vmem:[%s267 + $0x8] sm:$0xff]
    %v270 = vld [vmem:[%s267 + $0x10] sm:$0xff]
    %v271 = vld [vmem:[%s267 + $0x18] sm:$0xff]
    %v272 = vld [vmem:[%s267 + $0x20] sm:$0xff]
    %v273 = vld [vmem:[%s267 + $0x28] sm:$0xff]
    %v274 = vld [vmem:[%s267 + $0x30] sm:$0xff]
    %v275 = vld [vmem:[%s267 + $0x38] sm:$0xff]
    %v276 = vld [vmem:[%s267 + $0x40] sm:$0xff]
    %v277 = vld [vmem:[%s267 + $0x48] sm:$0xff]
    %v278 = vld [vmem:[%s267 + $0x50] sm:$0xff]
    %v279 = vld [vmem:[%s267 + $0x58] sm:$0xff]
    %v280 = vld [vmem:[%s267 + $0x60] sm:$0xff]
    %v281 = vld [vmem:[%s267 + $0x68] sm:$0xff]
    %v282 = vld [vmem:[%s267 + $0x70] sm:$0xff]
    %v283 = vld [vmem:[%s267 + $0x78] sm:$0xff]
    %v284 = vld [vmem:[%s267 + $0x80] sm:$0xff]
    %v285 = vld [vmem:[%s267 + $0x88] sm:$0xff]
    %v286 = vld [vmem:[%s267 + $0x90] sm:$0xff]
    %v287 = vld [vmem:[%s267 + $0x98] sm:$0xff]
    %v288 = vld [vmem:[%s267 + $0xa0] sm:$0xff]
    %v289 = vld [vmem:[%s267 + $0xa8] sm:$0xff]
    %v290 = vld [vmem:[%s267 + $0xb0] sm:$0xff]
    %v291 = vld [vmem:[%s267 + $0xb8] sm:$0xff]
    %v292 = vld [vmem:[%s267 + $0xc0] sm:$0xff]
    %v293 = vld [vmem:[%s267 + $0xc8] sm:$0xff]
    %v294 = vld [vmem:[%s267 + $0xd0] sm:$0xff]
    %v295 = vld [vmem:[%s267 + $0xd8] sm:$0xff]
    %v296 = vld [vmem:[%s267 + $0xe0] sm:$0xff]
    %v297 = vld [vmem:[%s267 + $0xe8] sm:$0xff]
    %v298 = vld [vmem:[%s267 + $0xf0] sm:$0xff]
    %v299 = vld [vmem:[%s267 + $0xf8] sm:$0xff]
    %s300 = sld [smem:[#allocation5 + $0x2]]
    %s301 = sld [smem:[#allocation3 + $0x2]]
    %v302 = vstv %s301
    %303 = vmatprep.subr.mxu0 0.0
    %304 = vmatpush1.msra.mxu0 %v268
    %305 = vmatprep.subr.mxu0 0.0
    %306 = vmatpush1.msra.mxu0 %v269
    %307 = vmatprep.subr.mxu0 0.0
    %308 = vmatpush1.msra.mxu0 %v270
    %309 = vmatprep.subr.mxu0 0.0
    %310 = vmatpush1.msra.mxu0 %v271
    %311 = vmatprep.subr.mxu0 0.0
    %312 = vmatpush1.msra.mxu0 %v272
    %313 = vmatprep.subr.mxu0 0.0
    %314 = vmatpush1.msra.mxu0 %v273
    %315 = vmatprep.subr.mxu0 0.0
    %316 = vmatpush1.msra.mxu0 %v274
    %317 = vmatprep.subr.mxu0 0.0
    %318 = vmatpush1.msra.mxu0 %v275
    %319 = vmatprep.subr.mxu0 0.0
    %320 = vmatpush1.msra.mxu0 %v276
    %321 = vmatprep.subr.mxu0 0.0
    %322 = vmatpush1.msra.mxu0 %v277
    %323 = vmatprep.subr.mxu0 0.0
    %324 = vmatpush1.msra.mxu0 %v278
    %325 = vmatprep.subr.mxu0 0.0
    %326 = vmatpush1.msra.mxu0 %v279
    %327 = vmatprep.subr.mxu0 0.0
    %328 = vmatpush1.msra.mxu0 %v280
    %329 = vmatprep.subr.mxu0 0.0
    %330 = vmatpush1.msra.mxu0 %v281
    %331 = vmatprep.subr.mxu0 0.0
    %332 = vmatpush1.msra.mxu0 %v282
    %333 = vmatprep.subr.mxu0 0.0
    %334 = vmatpush1.msra.mxu0 %v283
    %335 = vmatprep.subr.mxu0 0.0
    %336 = vmatpush1.msra.mxu0 %v284
    %337 = vmatprep.subr.mxu0 0.0
    %338 = vmatpush1.msra.mxu0 %v285
    %339 = vmatprep.subr.mxu0 0.0
    %340 = vmatpush1.msra.mxu0 %v286
    %341 = vmatprep.subr.mxu0 0.0
    %342 = vmatpush1.msra.mxu0 %v287
    %343 = vmatprep.subr.mxu0 0.0
    %344 = vmatpush1.msra.mxu0 %v288
    %345 = vmatprep.subr.mxu0 0.0
    %346 = vmatpush1.msra.mxu0 %v289
    %347 = vmatprep.subr.mxu0 0.0
    %348 = vmatpush1.msra.mxu0 %v290
    %349 = vmatprep.subr.mxu0 0.0
    %350 = vmatpush1.msra.mxu0 %v291
    %351 = vmatprep.subr.mxu0 0.0
    %352 = vmatpush1.msra.mxu0 %v292
    %353 = vmatprep.subr.mxu0 0.0
    %354 = vmatpush1.msra.mxu0 %v293
    %355 = vmatprep.subr.mxu0 0.0
    %356 = vmatpush1.msra.mxu0 %v294
    %357 = vmatprep.subr.mxu0 0.0
    %358 = vmatpush1.msra.mxu0 %v295
    %359 = vmatprep.subr.mxu0 0.0
    %360 = vmatpush1.msra.mxu0 %v296
    %361 = vmatprep.subr.mxu0 0.0
    %362 = vmatpush1.msra.mxu0 %v297
    %363 = vmatprep.subr.mxu0 0.0
    %364 = vmatpush1.msra.mxu0 %v298
    %365 = vmatprep.subr.mxu0 0.0
    %366 = vmatpush1.msra.mxu0 %v299
    %367 = vmatprep.mubr.f32.mxu0 %v47
    %368 = vmatmul.mubr.f32.gmra.mrb[0].mxu0 %v46
    %v369 = vpop.f32.mrb[0].mxu0
    %v370 = vadd.f32 %v302, %v369
    %v371 = vpop.f32.mrb[0].mxu0
    %372 = vdwg.mxu0
    %v373 = vmax.f32 %v370, 0.0
    %v374 = vstv %s300
    %v375 = vmul.f32 %v374, %v373
    %v376 = vadd.f32 %v266, %v375
    %s377 = scalar_lea.vmem %s1, 768
    %v378 = vld [vmem:[%s377] sm:$0xff]
    %v379 = vld [vmem:[%s377 + $0x8] sm:$0xff]
    %v380 = vld [vmem:[%s377 + $0x10] sm:$0xff]
    %v381 = vld [vmem:[%s377 + $0x18] sm:$0xff]
    %v382 = vld [vmem:[%s377 + $0x20] sm:$0xff]
    %v383 = vld [vmem:[%s377 + $0x28] sm:$0xff]
    %v384 = vld [vmem:[%s377 + $0x30] sm:$0xff]
    %v385 = vld [vmem:[%s377 + $0x38] sm:$0xff]
    %v386 = vld [vmem:[%s377 + $0x40] sm:$0xff]
    %v387 = vld [vmem:[%s377 + $0x48] sm:$0xff]
    %v388 = vld [vmem:[%s377 + $0x50] sm:$0xff]
    %v389 = vld [vmem:[%s377 + $0x58] sm:$0xff]
    %v390 = vld [vmem:[%s377 + $0x60] sm:$0xff]
    %v391 = vld [vmem:[%s377 + $0x68] sm:$0xff]
    %v392 = vld [vmem:[%s377 + $0x70] sm:$0xff]
    %v393 = vld [vmem:[%s377 + $0x78] sm:$0xff]
    %v394 = vld [vmem:[%s377 + $0x80] sm:$0xff]
    %v395 = vld [vmem:[%s377 + $0x88] sm:$0xff]
    %v396 = vld [vmem:[%s377 + $0x90] sm:$0xff]
    %v397 = vld [vmem:[%s377 + $0x98] sm:$0xff]
    %v398 = vld [vmem:[%s377 + $0xa0] sm:$0xff]
    %v399 = vld [vmem:[%s377 + $0xa8] sm:$0xff]
    %v400 = vld [vmem:[%s377 + $0xb0] sm:$0xff]
    %v401 = vld [vmem:[%s377 + $0xb8] sm:$0xff]
    %v402 = vld [vmem:[%s377 + $0xc0] sm:$0xff]
    %v403 = vld [vmem:[%s377 + $0xc8] sm:$0xff]
    %v404 = vld [vmem:[%s377 + $0xd0] sm:$0xff]
    %v405 = vld [vmem:[%s377 + $0xd8] sm:$0xff]
    %v406 = vld [vmem:[%s377 + $0xe0] sm:$0xff]
    %v407 = vld [vmem:[%s377 + $0xe8] sm:$0xff]
    %v408 = vld [vmem:[%s377 + $0xf0] sm:$0xff]
    %v409 = vld [vmem:[%s377 + $0xf8] sm:$0xff]
    %s410 = sld [smem:[#allocation5 + $0x3]]
    %s411 = sld [smem:[#allocation3 + $0x3]]
    %v412 = vstv %s411
    %413 = vmatprep.subr.mxu0 0.0
    %414 = vmatpush1.msra.mxu0 %v378
    %415 = vmatprep.subr.mxu0 0.0
    %416 = vmatpush1.msra.mxu0 %v379
    %417 = vmatprep.subr.mxu0 0.0
    %418 = vmatpush1.msra.mxu0 %v380
    %419 = vmatprep.subr.mxu0 0.0
    %420 = vmatpush1.msra.mxu0 %v381
    %421 = vmatprep.subr.mxu0 0.0
    %422 = vmatpush1.msra.mxu0 %v382
    %423 = vmatprep.subr.mxu0 0.0
    %424 = vmatpush1.msra.mxu0 %v383
    %425 = vmatprep.subr.mxu0 0.0
    %426 = vmatpush1.msra.mxu0 %v384
    %427 = vmatprep.subr.mxu0 0.0
    %428 = vmatpush1.msra.mxu0 %v385
    %429 = vmatprep.subr.mxu0 0.0
    %430 = vmatpush1.msra.mxu0 %v386
    %431 = vmatprep.subr.mxu0 0.0
    %432 = vmatpush1.msra.mxu0 %v387
    %433 = vmatprep.subr.mxu0 0.0
    %434 = vmatpush1.msra.mxu0 %v388
    %435 = vmatprep.subr.mxu0 0.0
    %436 = vmatpush1.msra.mxu0 %v389
    %437 = vmatprep.subr.mxu0 0.0
    %438 = vmatpush1.msra.mxu0 %v390
    %439 = vmatprep.subr.mxu0 0.0
    %440 = vmatpush1.msra.mxu0 %v391
    %441 = vmatprep.subr.mxu0 0.0
    %442 = vmatpush1.msra.mxu0 %v392
    %443 = vmatprep.subr.mxu0 0.0
    %444 = vmatpush1.msra.mxu0 %v393
    %445 = vmatprep.subr.mxu0 0.0
    %446 = vmatpush1.msra.mxu0 %v394
    %447 = vmatprep.subr.mxu0 0.0
    %448 = vmatpush1.msra.mxu0 %v395
    %449 = vmatprep.subr.mxu0 0.0
    %450 = vmatpush1.msra.mxu0 %v396
    %451 = vmatprep.subr.mxu0 0.0
    %452 = vmatpush1.msra.mxu0 %v397
    %453 = vmatprep.subr.mxu0 0.0
    %454 = vmatpush1.msra.mxu0 %v398
    %455 = vmatprep.subr.mxu0 0.0
    %456 = vmatpush1.msra.mxu0 %v399
    %457 = vmatprep.subr.mxu0 0.0
    %458 = vmatpush1.msra.mxu0 %v400
    %459 = vmatprep.subr.mxu0 0.0
    %460 = vmatpush1.msra.mxu0 %v401
    %461 = vmatprep.subr.mxu0 0.0
    %462 = vmatpush1.msra.mxu0 %v402
    %463 = vmatprep.subr.mxu0 0.0
    %464 = vmatpush1.msra.mxu0 %v403
    %465 = vmatprep.subr.mxu0 0.0
    %466 = vmatpush1.msra.mxu0 %v404
    %467 = vmatprep.subr.mxu0 0.0
    %468 = vmatpush1.msra.mxu0 %v405
    %469 = vmatprep.subr.mxu0 0.0
    %470 = vmatpush1.msra.mxu0 %v406
    %471 = vmatprep.subr.mxu0 0.0
    %472 = vmatpush1.msra.mxu0 %v407
    %473 = vmatprep.subr.mxu0 0.0
    %474 = vmatpush1.msra.mxu0 %v408
    %475 = vmatprep.subr.mxu0 0.0
    %476 = vmatpush1.msra.mxu0 %v409
    %477 = vmatprep.mubr.f32.mxu0 %v47
    %478 = vmatmul.mubr.f32.gmra.mrb[0].mxu0 %v46
    %v479 = vpop.f32.mrb[0].mxu0
    %v480 = vadd.f32 %v412, %v479
    %v481 = vpop.f32.mrb[0].mxu0
    %482 = vdwg.mxu0
    %v483 = vmax.f32 %v480, 0.0
    %v484 = vstv %s410
    %v485 = vmul.f32 %v484, %v483
    %v486 = vadd.f32 %v376, %v485
    %s487 = scalar_lea.vmem %s1, 1024
    %v488 = vld [vmem:[%s487] sm:$0xff]
    %v489 = vld [vmem:[%s487 + $0x8] sm:$0xff]
    %v490 = vld [vmem:[%s487 + $0x10] sm:$0xff]
    %v491 = vld [vmem:[%s487 + $0x18] sm:$0xff]
    %v492 = vld [vmem:[%s487 + $0x20] sm:$0xff]
    %v493 = vld [vmem:[%s487 + $0x28] sm:$0xff]
    %v494 = vld [vmem:[%s487 + $0x30] sm:$0xff]
    %v495 = vld [vmem:[%s487 + $0x38] sm:$0xff]
    %v496 = vld [vmem:[%s487 + $0x40] sm:$0xff]
    %v497 = vld [vmem:[%s487 + $0x48] sm:$0xff]
    %v498 = vld [vmem:[%s487 + $0x50] sm:$0xff]
    %v499 = vld [vmem:[%s487 + $0x58] sm:$0xff]
    %v500 = vld [vmem:[%s487 + $0x60] sm:$0xff]
    %v501 = vld [vmem:[%s487 + $0x68] sm:$0xff]
    %v502 = vld [vmem:[%s487 + $0x70] sm:$0xff]
    %v503 = vld [vmem:[%s487 + $0x78] sm:$0xff]
    %v504 = vld [vmem:[%s487 + $0x80] sm:$0xff]
    %v505 = vld [vmem:[%s487 + $0x88] sm:$0xff]
    %v506 = vld [vmem:[%s487 + $0x90] sm:$0xff]
    %v507 = vld [vmem:[%s487 + $0x98] sm:$0xff]
    %v508 = vld [vmem:[%s487 + $0xa0] sm:$0xff]
    %v509 = vld [vmem:[%s487 + $0xa8] sm:$0xff]
    %v510 = vld [vmem:[%s487 + $0xb0] sm:$0xff]
    %v511 = vld [vmem:[%s487 + $0xb8] sm:$0xff]
    %v512 = vld [vmem:[%s487 + $0xc0] sm:$0xff]
    %v513 = vld [vmem:[%s487 + $0xc8] sm:$0xff]
    %v514 = vld [vmem:[%s487 + $0xd0] sm:$0xff]
    %v515 = vld [vmem:[%s487 + $0xd8] sm:$0xff]
    %v516 = vld [vmem:[%s487 + $0xe0] sm:$0xff]
    %v517 = vld [vmem:[%s487 + $0xe8] sm:$0xff]
    %v518 = vld [vmem:[%s487 + $0xf0] sm:$0xff]
    %v519 = vld [vmem:[%s487 + $0xf8] sm:$0xff]
    %s520 = sld [smem:[#allocation5 + $0x4]]
    %s521 = sld [smem:[#allocation3 + $0x4]]
    %v522 = vstv %s521
    %523 = vmatprep.subr.mxu0 0.0
    %524 = vmatpush1.msra.mxu0 %v488
    %525 = vmatprep.subr.mxu0 0.0
    %526 = vmatpush1.msra.mxu0 %v489
    %527 = vmatprep.subr.mxu0 0.0
    %528 = vmatpush1.msra.mxu0 %v490
    %529 = vmatprep.subr.mxu0 0.0
    %530 = vmatpush1.msra.mxu0 %v491
    %531 = vmatprep.subr.mxu0 0.0
    %532 = vmatpush1.msra.mxu0 %v492
    %533 = vmatprep.subr.mxu0 0.0
    %534 = vmatpush1.msra.mxu0 %v493
    %535 = vmatprep.subr.mxu0 0.0
    %536 = vmatpush1.msra.mxu0 %v494
    %537 = vmatprep.subr.mxu0 0.0
    %538 = vmatpush1.msra.mxu0 %v495
    %539 = vmatprep.subr.mxu0 0.0
    %540 = vmatpush1.msra.mxu0 %v496
    %541 = vmatprep.subr.mxu0 0.0
    %542 = vmatpush1.msra.mxu0 %v497
    %543 = vmatprep.subr.mxu0 0.0
    %544 = vmatpush1.msra.mxu0 %v498
    %545 = vmatprep.subr.mxu0 0.0
    %546 = vmatpush1.msra.mxu0 %v499
    %547 = vmatprep.subr.mxu0 0.0
    %548 = vmatpush1.msra.mxu0 %v500
    %549 = vmatprep.subr.mxu0 0.0
    %550 = vmatpush1.msra.mxu0 %v501
    %551 = vmatprep.subr.mxu0 0.0
    %552 = vmatpush1.msra.mxu0 %v502
    %553 = vmatprep.subr.mxu0 0.0
    %554 = vmatpush1.msra.mxu0 %v503
    %555 = vmatprep.subr.mxu0 0.0
    %556 = vmatpush1.msra.mxu0 %v504
    %557 = vmatprep.subr.mxu0 0.0
    %558 = vmatpush1.msra.mxu0 %v505
    %559 = vmatprep.subr.mxu0 0.0
    %560 = vmatpush1.msra.mxu0 %v506
    %561 = vmatprep.subr.mxu0 0.0
    %562 = vmatpush1.msra.mxu0 %v507
    %563 = vmatprep.subr.mxu0 0.0
    %564 = vmatpush1.msra.mxu0 %v508
    %565 = vmatprep.subr.mxu0 0.0
    %566 = vmatpush1.msra.mxu0 %v509
    %567 = vmatprep.subr.mxu0 0.0
    %568 = vmatpush1.msra.mxu0 %v510
    %569 = vmatprep.subr.mxu0 0.0
    %570 = vmatpush1.msra.mxu0 %v511
    %571 = vmatprep.subr.mxu0 0.0
    %572 = vmatpush1.msra.mxu0 %v512
    %573 = vmatprep.subr.mxu0 0.0
    %574 = vmatpush1.msra.mxu0 %v513
    %575 = vmatprep.subr.mxu0 0.0
    %576 = vmatpush1.msra.mxu0 %v514
    %577 = vmatprep.subr.mxu0 0.0
    %578 = vmatpush1.msra.mxu0 %v515
    %579 = vmatprep.subr.mxu0 0.0
    %580 = vmatpush1.msra.mxu0 %v516
    %581 = vmatprep.subr.mxu0 0.0
    %582 = vmatpush1.msra.mxu0 %v517
    %583 = vmatprep.subr.mxu0 0.0
    %584 = vmatpush1.msra.mxu0 %v518
    %585 = vmatprep.subr.mxu0 0.0
    %586 = vmatpush1.msra.mxu0 %v519
    %587 = vmatprep.mubr.f32.mxu0 %v47
    %588 = vmatmul.mubr.f32.gmra.mrb[0].mxu0 %v46
    %v589 = vpop.f32.mrb[0].mxu0
    %v590 = vadd.f32 %v522, %v589
    %v591 = vpop.f32.mrb[0].mxu0
    %592 = vdwg.mxu0
    %v593 = vmax.f32 %v590, 0.0
    %v594 = vstv %s520
    %v595 = vmul.f32 %v594, %v593
    %v596 = vadd.f32 %v486, %v595
    %s597 = scalar_lea.vmem %s1, 1280
    %v598 = vld [vmem:[%s597] sm:$0xff]
    %v599 = vld [vmem:[%s597 + $0x8] sm:$0xff]
    %v600 = vld [vmem:[%s597 + $0x10] sm:$0xff]
    %v601 = vld [vmem:[%s597 + $0x18] sm:$0xff]
    %v602 = vld [vmem:[%s597 + $0x20] sm:$0xff]
    %v603 = vld [vmem:[%s597 + $0x28] sm:$0xff]
    %v604 = vld [vmem:[%s597 + $0x30] sm:$0xff]
    %v605 = vld [vmem:[%s597 + $0x38] sm:$0xff]
    %v606 = vld [vmem:[%s597 + $0x40] sm:$0xff]
    %v607 = vld [vmem:[%s597 + $0x48] sm:$0xff]
    %v608 = vld [vmem:[%s597 + $0x50] sm:$0xff]
    %v609 = vld [vmem:[%s597 + $0x58] sm:$0xff]
    %v610 = vld [vmem:[%s597 + $0x60] sm:$0xff]
    %v611 = vld [vmem:[%s597 + $0x68] sm:$0xff]
    %v612 = vld [vmem:[%s597 + $0x70] sm:$0xff]
    %v613 = vld [vmem:[%s597 + $0x78] sm:$0xff]
    %v614 = vld [vmem:[%s597 + $0x80] sm:$0xff]
    %v615 = vld [vmem:[%s597 + $0x88] sm:$0xff]
    %v616 = vld [vmem:[%s597 + $0x90] sm:$0xff]
    %v617 = vld [vmem:[%s597 + $0x98] sm:$0xff]
    %v618 = vld [vmem:[%s597 + $0xa0] sm:$0xff]
    %v619 = vld [vmem:[%s597 + $0xa8] sm:$0xff]
    %v620 = vld [vmem:[%s597 + $0xb0] sm:$0xff]
    %v621 = vld [vmem:[%s597 + $0xb8] sm:$0xff]
    %v622 = vld [vmem:[%s597 + $0xc0] sm:$0xff]
    %v623 = vld [vmem:[%s597 + $0xc8] sm:$0xff]
    %v624 = vld [vmem:[%s597 + $0xd0] sm:$0xff]
    %v625 = vld [vmem:[%s597 + $0xd8] sm:$0xff]
    %v626 = vld [vmem:[%s597 + $0xe0] sm:$0xff]
    %v627 = vld [vmem:[%s597 + $0xe8] sm:$0xff]
    %v628 = vld [vmem:[%s597 + $0xf0] sm:$0xff]
    %v629 = vld [vmem:[%s597 + $0xf8] sm:$0xff]
    %s630 = sld [smem:[#allocation5 + $0x5]]
    %s631 = sld [smem:[#allocation3 + $0x5]]
    %v632 = vstv %s631
    %633 = vmatprep.subr.mxu0 0.0
    %634 = vmatpush1.msra.mxu0 %v598
    %635 = vmatprep.subr.mxu0 0.0
    %636 = vmatpush1.msra.mxu0 %v599
    %637 = vmatprep.subr.mxu0 0.0
    %638 = vmatpush1.msra.mxu0 %v600
    %639 = vmatprep.subr.mxu0 0.0
    %640 = vmatpush1.msra.mxu0 %v601
    %641 = vmatprep.subr.mxu0 0.0
    %642 = vmatpush1.msra.mxu0 %v602
    %643 = vmatprep.subr.mxu0 0.0
    %644 = vmatpush1.msra.mxu0 %v603
    %645 = vmatprep.subr.mxu0 0.0
    %646 = vmatpush1.msra.mxu0 %v604
    %647 = vmatprep.subr.mxu0 0.0
    %648 = vmatpush1.msra.mxu0 %v605
    %649 = vmatprep.subr.mxu0 0.0
    %650 = vmatpush1.msra.mxu0 %v606
    %651 = vmatprep.subr.mxu0 0.0
    %652 = vmatpush1.msra.mxu0 %v607
    %653 = vmatprep.subr.mxu0 0.0
    %654 = vmatpush1.msra.mxu0 %v608
    %655 = vmatprep.subr.mxu0 0.0
    %656 = vmatpush1.msra.mxu0 %v609
    %657 = vmatprep.subr.mxu0 0.0
    %658 = vmatpush1.msra.mxu0 %v610
    %659 = vmatprep.subr.mxu0 0.0
    %660 = vmatpush1.msra.mxu0 %v611
    %661 = vmatprep.subr.mxu0 0.0
    %662 = vmatpush1.msra.mxu0 %v612
    %663 = vmatprep.subr.mxu0 0.0
    %664 = vmatpush1.msra.mxu0 %v613
    %665 = vmatprep.subr.mxu0 0.0
    %666 = vmatpush1.msra.mxu0 %v614
    %667 = vmatprep.subr.mxu0 0.0
    %668 = vmatpush1.msra.mxu0 %v615
    %669 = vmatprep.subr.mxu0 0.0
    %670 = vmatpush1.msra.mxu0 %v616
    %671 = vmatprep.subr.mxu0 0.0
    %672 = vmatpush1.msra.mxu0 %v617
    %673 = vmatprep.subr.mxu0 0.0
    %674 = vmatpush1.msra.mxu0 %v618
    %675 = vmatprep.subr.mxu0 0.0
    %676 = vmatpush1.msra.mxu0 %v619
    %677 = vmatprep.subr.mxu0 0.0
    %678 = vmatpush1.msra.mxu0 %v620
    %679 = vmatprep.subr.mxu0 0.0
    %680 = vmatpush1.msra.mxu0 %v621
    %681 = vmatprep.subr.mxu0 0.0
    %682 = vmatpush1.msra.mxu0 %v622
    %683 = vmatprep.subr.mxu0 0.0
    %684 = vmatpush1.msra.mxu0 %v623
    %685 = vmatprep.subr.mxu0 0.0
    %686 = vmatpush1.msra.mxu0 %v624
    %687 = vmatprep.subr.mxu0 0.0
    %688 = vmatpush1.msra.mxu0 %v625
    %689 = vmatprep.subr.mxu0 0.0
    %690 = vmatpush1.msra.mxu0 %v626
    %691 = vmatprep.subr.mxu0 0.0
    %692 = vmatpush1.msra.mxu0 %v627
    %693 = vmatprep.subr.mxu0 0.0
    %694 = vmatpush1.msra.mxu0 %v628
    %695 = vmatprep.subr.mxu0 0.0
    %696 = vmatpush1.msra.mxu0 %v629
    %697 = vmatprep.mubr.f32.mxu0 %v47
    %698 = vmatmul.mubr.f32.gmra.mrb[0].mxu0 %v46
    %v699 = vpop.f32.mrb[0].mxu0
    %v700 = vadd.f32 %v632, %v699
    %v701 = vpop.f32.mrb[0].mxu0
    %702 = vdwg.mxu0
    %v703 = vmax.f32 %v700, 0.0
    %v704 = vstv %s630
    %v705 = vmul.f32 %v704, %v703
    %v706 = vadd.f32 %v596, %v705
    %s707 = scalar_lea.vmem %s1, 1536
    %v708 = vld [vmem:[%s707] sm:$0xff]
    %v709 = vld [vmem:[%s707 + $0x8] sm:$0xff]
    %v710 = vld [vmem:[%s707 + $0x10] sm:$0xff]
    %v711 = vld [vmem:[%s707 + $0x18] sm:$0xff]
    %v712 = vld [vmem:[%s707 + $0x20] sm:$0xff]
    %v713 = vld [vmem:[%s707 + $0x28] sm:$0xff]
    %v714 = vld [vmem:[%s707 + $0x30] sm:$0xff]
    %v715 = vld [vmem:[%s707 + $0x38] sm:$0xff]
    %v716 = vld [vmem:[%s707 + $0x40] sm:$0xff]
    %v717 = vld [vmem:[%s707 + $0x48] sm:$0xff]
    %v718 = vld [vmem:[%s707 + $0x50] sm:$0xff]
    %v719 = vld [vmem:[%s707 + $0x58] sm:$0xff]
    %v720 = vld [vmem:[%s707 + $0x60] sm:$0xff]
    %v721 = vld [vmem:[%s707 + $0x68] sm:$0xff]
    %v722 = vld [vmem:[%s707 + $0x70] sm:$0xff]
    %v723 = vld [vmem:[%s707 + $0x78] sm:$0xff]
    %v724 = vld [vmem:[%s707 + $0x80] sm:$0xff]
    %v725 = vld [vmem:[%s707 + $0x88] sm:$0xff]
    %v726 = vld [vmem:[%s707 + $0x90] sm:$0xff]
    %v727 = vld [vmem:[%s707 + $0x98] sm:$0xff]
    %v728 = vld [vmem:[%s707 + $0xa0] sm:$0xff]
    %v729 = vld [vmem:[%s707 + $0xa8] sm:$0xff]
    %v730 = vld [vmem:[%s707 + $0xb0] sm:$0xff]
    %v731 = vld [vmem:[%s707 + $0xb8] sm:$0xff]
    %v732 = vld [vmem:[%s707 + $0xc0] sm:$0xff]
    %v733 = vld [vmem:[%s707 + $0xc8] sm:$0xff]
    %v734 = vld [vmem:[%s707 + $0xd0] sm:$0xff]
    %v735 = vld [vmem:[%s707 + $0xd8] sm:$0xff]
    %v736 = vld [vmem:[%s707 + $0xe0] sm:$0xff]
    %v737 = vld [vmem:[%s707 + $0xe8] sm:$0xff]
    %v738 = vld [vmem:[%s707 + $0xf0] sm:$0xff]
    %v739 = vld [vmem:[%s707 + $0xf8] sm:$0xff]
    %s740 = sld [smem:[#allocation5 + $0x6]]
    %s741 = sld [smem:[#allocation3 + $0x6]]
    %v742 = vstv %s741
    %743 = vmatprep.subr.mxu0 0.0
    %744 = vmatpush1.msra.mxu0 %v708
    %745 = vmatprep.subr.mxu0 0.0
    %746 = vmatpush1.msra.mxu0 %v709
    %747 = vmatprep.subr.mxu0 0.0
    %748 = vmatpush1.msra.mxu0 %v710
    %749 = vmatprep.subr.mxu0 0.0
    %750 = vmatpush1.msra.mxu0 %v711
    %751 = vmatprep.subr.mxu0 0.0
    %752 = vmatpush1.msra.mxu0 %v712
    %753 = vmatprep.subr.mxu0 0.0
    %754 = vmatpush1.msra.mxu0 %v713
    %755 = vmatprep.subr.mxu0 0.0
    %756 = vmatpush1.msra.mxu0 %v714
    %757 = vmatprep.subr.mxu0 0.0
    %758 = vmatpush1.msra.mxu0 %v715
    %759 = vmatprep.subr.mxu0 0.0
    %760 = vmatpush1.msra.mxu0 %v716
    %761 = vmatprep.subr.mxu0 0.0
    %762 = vmatpush1.msra.mxu0 %v717
    %763 = vmatprep.subr.mxu0 0.0
    %764 = vmatpush1.msra.mxu0 %v718
    %765 = vmatprep.subr.mxu0 0.0
    %766 = vmatpush1.msra.mxu0 %v719
    %767 = vmatprep.subr.mxu0 0.0
    %768 = vmatpush1.msra.mxu0 %v720
    %769 = vmatprep.subr.mxu0 0.0
    %770 = vmatpush1.msra.mxu0 %v721
    %771 = vmatprep.subr.mxu0 0.0
    %772 = vmatpush1.msra.mxu0 %v722
    %773 = vmatprep.subr.mxu0 0.0
    %774 = vmatpush1.msra.mxu0 %v723
    %775 = vmatprep.subr.mxu0 0.0
    %776 = vmatpush1.msra.mxu0 %v724
    %777 = vmatprep.subr.mxu0 0.0
    %778 = vmatpush1.msra.mxu0 %v725
    %779 = vmatprep.subr.mxu0 0.0
    %780 = vmatpush1.msra.mxu0 %v726
    %781 = vmatprep.subr.mxu0 0.0
    %782 = vmatpush1.msra.mxu0 %v727
    %783 = vmatprep.subr.mxu0 0.0
    %784 = vmatpush1.msra.mxu0 %v728
    %785 = vmatprep.subr.mxu0 0.0
    %786 = vmatpush1.msra.mxu0 %v729
    %787 = vmatprep.subr.mxu0 0.0
    %788 = vmatpush1.msra.mxu0 %v730
    %789 = vmatprep.subr.mxu0 0.0
    %790 = vmatpush1.msra.mxu0 %v731
    %791 = vmatprep.subr.mxu0 0.0
    %792 = vmatpush1.msra.mxu0 %v732
    %793 = vmatprep.subr.mxu0 0.0
    %794 = vmatpush1.msra.mxu0 %v733
    %795 = vmatprep.subr.mxu0 0.0
    %796 = vmatpush1.msra.mxu0 %v734
    %797 = vmatprep.subr.mxu0 0.0
    %798 = vmatpush1.msra.mxu0 %v735
    %799 = vmatprep.subr.mxu0 0.0
    %800 = vmatpush1.msra.mxu0 %v736
    %801 = vmatprep.subr.mxu0 0.0
    %802 = vmatpush1.msra.mxu0 %v737
    %803 = vmatprep.subr.mxu0 0.0
    %804 = vmatpush1.msra.mxu0 %v738
    %805 = vmatprep.subr.mxu0 0.0
    %806 = vmatpush1.msra.mxu0 %v739
    %807 = vmatprep.mubr.f32.mxu0 %v47
    %808 = vmatmul.mubr.f32.gmra.mrb[0].mxu0 %v46
    %v809 = vpop.f32.mrb[0].mxu0
    %v810 = vadd.f32 %v742, %v809
    %v811 = vpop.f32.mrb[0].mxu0
    %812 = vdwg.mxu0
    %v813 = vmax.f32 %v810, 0.0
    %v814 = vstv %s740
    %v815 = vmul.f32 %v814, %v813
    %v816 = vadd.f32 %v706, %v815
    %s817 = scalar_lea.vmem %s1, 1792
    %v818 = vld [vmem:[%s817] sm:$0xff]
    %v819 = vld [vmem:[%s817 + $0x8] sm:$0xff]
    %v820 = vld [vmem:[%s817 + $0x10] sm:$0xff]
    %v821 = vld [vmem:[%s817 + $0x18] sm:$0xff]
    %v822 = vld [vmem:[%s817 + $0x20] sm:$0xff]
    %v823 = vld [vmem:[%s817 + $0x28] sm:$0xff]
    %v824 = vld [vmem:[%s817 + $0x30] sm:$0xff]
    %v825 = vld [vmem:[%s817 + $0x38] sm:$0xff]
    %v826 = vld [vmem:[%s817 + $0x40] sm:$0xff]
    %v827 = vld [vmem:[%s817 + $0x48] sm:$0xff]
    %v828 = vld [vmem:[%s817 + $0x50] sm:$0xff]
    %v829 = vld [vmem:[%s817 + $0x58] sm:$0xff]
    %v830 = vld [vmem:[%s817 + $0x60] sm:$0xff]
    %v831 = vld [vmem:[%s817 + $0x68] sm:$0xff]
    %v832 = vld [vmem:[%s817 + $0x70] sm:$0xff]
    %v833 = vld [vmem:[%s817 + $0x78] sm:$0xff]
    %v834 = vld [vmem:[%s817 + $0x80] sm:$0xff]
    %v835 = vld [vmem:[%s817 + $0x88] sm:$0xff]
    %v836 = vld [vmem:[%s817 + $0x90] sm:$0xff]
    %v837 = vld [vmem:[%s817 + $0x98] sm:$0xff]
    %v838 = vld [vmem:[%s817 + $0xa0] sm:$0xff]
    %v839 = vld [vmem:[%s817 + $0xa8] sm:$0xff]
    %v840 = vld [vmem:[%s817 + $0xb0] sm:$0xff]
    %v841 = vld [vmem:[%s817 + $0xb8] sm:$0xff]
    %v842 = vld [vmem:[%s817 + $0xc0] sm:$0xff]
    %v843 = vld [vmem:[%s817 + $0xc8] sm:$0xff]
    %v844 = vld [vmem:[%s817 + $0xd0] sm:$0xff]
    %v845 = vld [vmem:[%s817 + $0xd8] sm:$0xff]
    %v846 = vld [vmem:[%s817 + $0xe0] sm:$0xff]
    %v847 = vld [vmem:[%s817 + $0xe8] sm:$0xff]
    %v848 = vld [vmem:[%s817 + $0xf0] sm:$0xff]
    %v849 = vld [vmem:[%s817 + $0xf8] sm:$0xff]
    %s850 = sld [smem:[#allocation5 + $0x7]]
    %s851 = sld [smem:[#allocation3 + $0x7]]
    %v852 = vstv %s851
    %853 = vmatprep.subr.mxu0 0.0
    %854 = vmatpush1.msra.mxu0 %v818
    %855 = vmatprep.subr.mxu0 0.0
    %856 = vmatpush1.msra.mxu0 %v819
    %857 = vmatprep.subr.mxu0 0.0
    %858 = vmatpush1.msra.mxu0 %v820
    %859 = vmatprep.subr.mxu0 0.0
    %860 = vmatpush1.msra.mxu0 %v821
    %861 = vmatprep.subr.mxu0 0.0
    %862 = vmatpush1.msra.mxu0 %v822
    %863 = vmatprep.subr.mxu0 0.0
    %864 = vmatpush1.msra.mxu0 %v823
    %865 = vmatprep.subr.mxu0 0.0
    %866 = vmatpush1.msra.mxu0 %v824
    %867 = vmatprep.subr.mxu0 0.0
    %868 = vmatpush1.msra.mxu0 %v825
    %869 = vmatprep.subr.mxu0 0.0
    %870 = vmatpush1.msra.mxu0 %v826
    %871 = vmatprep.subr.mxu0 0.0
    %872 = vmatpush1.msra.mxu0 %v827
    %873 = vmatprep.subr.mxu0 0.0
    %874 = vmatpush1.msra.mxu0 %v828
    %875 = vmatprep.subr.mxu0 0.0
    %876 = vmatpush1.msra.mxu0 %v829
    %877 = vmatprep.subr.mxu0 0.0
    %878 = vmatpush1.msra.mxu0 %v830
    %879 = vmatprep.subr.mxu0 0.0
    %880 = vmatpush1.msra.mxu0 %v831
    %881 = vmatprep.subr.mxu0 0.0
    %882 = vmatpush1.msra.mxu0 %v832
    %883 = vmatprep.subr.mxu0 0.0
    %884 = vmatpush1.msra.mxu0 %v833
    %885 = vmatprep.subr.mxu0 0.0
    %886 = vmatpush1.msra.mxu0 %v834
    %887 = vmatprep.subr.mxu0 0.0
    %888 = vmatpush1.msra.mxu0 %v835
    %889 = vmatprep.subr.mxu0 0.0
    %890 = vmatpush1.msra.mxu0 %v836
    %891 = vmatprep.subr.mxu0 0.0
    %892 = vmatpush1.msra.mxu0 %v837
    %893 = vmatprep.subr.mxu0 0.0
    %894 = vmatpush1.msra.mxu0 %v838
    %895 = vmatprep.subr.mxu0 0.0
    %896 = vmatpush1.msra.mxu0 %v839
    %897 = vmatprep.subr.mxu0 0.0
    %898 = vmatpush1.msra.mxu0 %v840
    %899 = vmatprep.subr.mxu0 0.0
    %900 = vmatpush1.msra.mxu0 %v841
    %901 = vmatprep.subr.mxu0 0.0
    %902 = vmatpush1.msra.mxu0 %v842
    %903 = vmatprep.subr.mxu0 0.0
    %904 = vmatpush1.msra.mxu0 %v843
    %905 = vmatprep.subr.mxu0 0.0
    %906 = vmatpush1.msra.mxu0 %v844
    %907 = vmatprep.subr.mxu0 0.0
    %908 = vmatpush1.msra.mxu0 %v845
    %909 = vmatprep.subr.mxu0 0.0
    %910 = vmatpush1.msra.mxu0 %v846
    %911 = vmatprep.subr.mxu0 0.0
    %912 = vmatpush1.msra.mxu0 %v847
    %913 = vmatprep.subr.mxu0 0.0
    %914 = vmatpush1.msra.mxu0 %v848
    %915 = vmatprep.subr.mxu0 0.0
    %916 = vmatpush1.msra.mxu0 %v849
    %917 = vmatprep.mubr.f32.mxu0 %v47
    %918 = vmatmul.mubr.f32.gmra.mrb[0].mxu0 %v46
    %v919 = vpop.f32.mrb[0].mxu0
    %v920 = vadd.f32 %v852, %v919
    %v921 = vpop.f32.mrb[0].mxu0
    %922 = vdwg.mxu0
    %v923 = vmax.f32 %v920, 0.0
    %v924 = vstv %s850
    %v925 = vmul.f32 %v924, %v923
    %v926 = vadd.f32 %v816, %v925
    %s927 = sld [smem:[#allocation2]]
    %v928 = vstv %s927
    %v929 = vadd.f32 %v926, %v928
    %930 = vst [vmem:[%s5] sm:$0xff] %v929
    // Predicated region
    $region30: #{motorbike_fuel_usage.1} parent=1 // pred_check
      _
    $region31: #{motorbike_fuel_usage.1} parent=1 // pred_check_branch
      %932 = sbr.rel (0) target = $region33
    $region32: #{motorbike_fuel_usage.1} parent=1 // pred_region
      _
    $region33: #{motorbike_fuel_usage.1} parent=1 // pred_fallthru
      _
    // Predicated region
    $region34: #{motorbike_fuel_usage.1} parent=1 // pred_check
      _
    $region35: #{motorbike_fuel_usage.1} parent=1 // pred_check_branch
      %934 = sbr.rel (0) target = $region37
    $region36: #{motorbike_fuel_usage.1} parent=1 // pred_region
      _
    $region37: #{motorbike_fuel_usage.1} parent=1 // pred_fallthru
      _
    %935 = vsyncpa [#allocation4], 1
    %936 = vsyncpa [#allocation6], 1

</llo_original>
